<compile_context>
chip_gen: v7x
topology: tpu7x:2x2x1
jax: 0.10.0
libtpu: 0.0.40
codegen_flags: <defaults>
</compile_context>

<pallas_src>
import jax
import jax.numpy as jnp
from jax import lax
from jax.experimental import pallas as pl
from jax.experimental.pallas import tpu as pltpu


def _cumsum_lanes(rows, length):
    """Inclusive prefix sum along the last (lane) axis of a (R, TL) block.

    Hillis-Steele scan: log2(TL) passes of lane rotate (XLU) + masked add (VPU).  The
    `lane >= shift` mask also prevents garbage in out-of-bounds tail lanes (partial last
    time block) from wrapping around into valid lanes.
    """
    lane = lax.broadcasted_iota(jnp.int32, rows.shape, 1)
    acc = rows
    shift = 1
    while shift < length:
        rolled = pltpu.roll(acc, shift, 1)              # rolled[:, i] = acc[:, i - shift]
        acc = acc + jnp.where(lane >= shift, rolled, 0.0)
        shift *= 2
    return acc


def _norm_kernel(x_ref, o_ref, carry_ref):
    TB, N, TL = x_ref.shape
    t = pl.program_id(1)

    # New batch block: reset the carried prefix statistics.
    @pl.when(t == 0)
    def _():
        carry_ref[...] = jnp.zeros_like(carry_ref)

    # Per-timestep channel sums / sums of squares for every packed batch row (2-D ops only).
    rows_s, rows_sq = [], []
    for b in range(TB):                                  # static unroll, TB <= 8
        xb = x_ref[b]                                    # (N, TL)
        rows_s.append(jnp.sum(xb, axis=0, keepdims=True))
        rows_sq.append(jnp.sum(xb * xb, axis=0, keepdims=True))
    rows = jnp.concatenate(rows_s + rows_sq, axis=0)     # (2*TB, TL): sums then sumsq

    # Fused causal prefix scan + carried prefix from earlier time blocks of this batch.
    carry = carry_ref[...]                               # (2*TB, 1)
    cum = _cumsum_lanes(rows, TL) + carry                # (2*TB, TL)
    carry_ref[...] = carry + jnp.sum(rows, axis=1, keepdims=True)

    # count[k] = N * (global_k + 1); one reciprocal instead of two divides.
    k_idx = lax.broadcasted_iota(jnp.int32, (1, TL), 1) + t * TL
    inv_count = 1.0 / (jnp.float32(N) * (k_idx + 1).astype(jnp.float32))   # (1, TL)

    mean = cum[:TB, :] * inv_count                       # (TB, TL)
    var = jnp.maximum(cum[TB:, :] * inv_count - mean * mean, 0.0)
    inv_std = lax.rsqrt(var)                             # eps = 0, as in the module

    # gamma == 1, beta == 0 -> identity affine, omitted.  Sublane-broadcast per batch row.
    for b in range(TB):
        o_ref[b] = (x_ref[b] - mean[b:b + 1, :]) * inv_std[b:b + 1, :]


def _choose_tiles(B, N, L):
    # Batch packing: fill sublanes of the scan rows / amortize per-grid-step overhead when
    # per-batch slabs are tiny, but keep >= 2 batch blocks (both v7x TCs) when B > 1.
    if N * L * 4 <= (1 << 20):
        TB = max(1, min(8, B // 2))
    else:
        TB = 1
    # Time tiling: a single full-extent block when it fits the per-block budget (then any L
    # is legal -- no padding, no tail copies); otherwise lane-dense multiples of 128 so
    # double-buffered in+out blocks stay far below v7x's 64 MiB VMEM and the pipeline has
    # plenty of stages even at small B.
    budget = 4 << 20
    if TB * N * L * 4 <= budget or L < 256:
        TL = L
    else:
        TL = min(2048, max(128, (budget // (TB * N * 4)) // 128 * 128))
    return TB, TL
    # TODO(synk): for huge channel counts (N*4 bytes per timestep alone exceeding the
    # budget) the channel axis would also need tiling with partial-sum carries.


def cumulative_norm(x, *, batch_tile=None, time_tile=None):
    """x: (B, N, L) float32 -> (B, N, L) float32 streaming layer norm."""
    B, N, L = x.shape
    TB, TL = _choose_tiles(B, N, L)
    if batch_tile is not None:
        TB = batch_tile
    if time_tile is not None:
        TL = time_tile
    assert TL == L or TL % 128 == 0, "time tile must be full L or a multiple of 128"

    grid = (pl.cdiv(B, TB), pl.cdiv(L, TL))
    block_bytes = TB * N * TL * 4
    # in + out double buffers plus temporaries; capped below v7x's 64 MiB physical VMEM.
    vmem_limit = int(min(48 << 20, max(16 << 20, 8 * block_bytes)))

    return pl.pallas_call(
        _norm_kernel,
        out_shape=jax.ShapeDtypeStruct((B, N, L), jnp.float32),
        grid_spec=pltpu.PrefetchScalarGridSpec(
            num_scalar_prefetch=0,
            grid=grid,
            in_specs=[pl.BlockSpec((TB, N, TL), lambda bi, ti: (bi, 0, ti))],
            out_specs=pl.BlockSpec((TB, N, TL), lambda bi, ti: (bi, 0, ti)),
            scratch_shapes=[pltpu.VMEM((2 * TB, 1), jnp.float32)],
        ),
        compiler_params=pltpu.CompilerParams(
            dimension_semantics=("parallel", "arbitrary"),
            vmem_limit_bytes=vmem_limit,
        ),
    )(x)


def _reference(x):
    """Pure-JAX reference matching the PyTorch loop semantics."""
    B, N, L = x.shape
    ks = jnp.arange(1, L + 1, dtype=jnp.float32)         # (L,)
    ch_sum = jnp.sum(x, axis=1)                          # (B, L)
    ch_sumsq = jnp.sum(x * x, axis=1)                    # (B, L)
    cum_s = jnp.cumsum(ch_sum, axis=-1)                  # (B, L)
    cum_sq = jnp.cumsum(ch_sumsq, axis=-1)               # (B, L)
    count = N * ks                                       # (L,)
    mean = cum_s / count                                 # (B, L)
    var = cum_sq / count - mean * mean                   # (B, L)
    return (x - mean[:, None, :]) / jnp.sqrt(var)[:, None, :]


if __name__ == "__main__":
    key = jax.random.PRNGKey(0)

    # Small shape consistent with the module's forward: (batch, channels, time).
    B, N, L = 2, 4, 16
    x = jax.random.normal(key, (B, N, L), dtype=jnp.float32)
    out = cumulative_norm(x)
    jax.block_until_ready(out)
    ref = _reference(x)
    assert out.shape == (B, N, L) and out.dtype == jnp.float32
    assert jnp.allclose(out, ref, atol=1e-4, rtol=1e-4), "mismatch vs reference (small)"

    # Exercise the tiled path: carried prefix across time blocks, partial batch block,
    # and a partial (masked) last time block.
    B2, N2, L2 = 3, 5, 320
    x2 = jax.random.normal(jax.random.PRNGKey(0), (B2, N2, L2), dtype=jnp.float32)
    out2 = cumulative_norm(x2, batch_tile=2, time_tile=128)
    jax.block_until_ready(out2)
    ref2 = _reference(x2)
    assert jnp.allclose(out2, ref2, atol=1e-4, rtol=1e-4), "mismatch vs reference (tiled)"

    print("KERNEL_OK")
</pallas_src>

<mosaic_0001>
module attributes {stable_mosaic.version = 11 : i64} {
  func.func @_norm_kernel(%arg0: i32, %arg1: i32, %arg2: memref<1x4x16xf32, #tpu.memory_space<vmem>>, %arg3: memref<1x4x16xf32, #tpu.memory_space<vmem>>, %arg4: memref<2x1xf32, #tpu.memory_space<vmem>>) attributes {dimension_semantics = [#tpu.dimension_semantics<parallel>, #tpu.dimension_semantics<arbitrary>], iteration_bounds = array<i64: 2, 1>, scalar_prefetch = 0 : i64, scratch_operands = 1 : i64, tpu.core_type = #tpu.core_type<tc>, window_params = [{transform_indices = @transform_0, window_bounds = array<i64: 1, 4, 16>}, {transform_indices = @transform_1, window_bounds = array<i64: 1, 4, 16>}]} {
    %c0_i32 = arith.constant 0 : i32
    %0 = arith.cmpi eq, %arg1, %c0_i32 : i32
    %1 = arith.extui %0 : i1 to i32
    %c0_i32_0 = arith.constant 0 : i32
    %2 = arith.cmpi ne, %1, %c0_i32_0 : i32
    scf.if %2 {
      %cst_27 = arith.constant 0.000000e+00 : f32
      %72 = vector.broadcast %cst_27 : f32 to vector<2x1xf32>
      %c0_28 = arith.constant 0 : index
      %c0_29 = arith.constant 0 : index
      %73 = vector.load %arg4[%c0_28, %c0_29] : memref<2x1xf32, #tpu.memory_space<vmem>>, vector<2x1xf32>
      tpu.vector_store %arg4[%c0_28, %c0_29], %72 {strides = array<i32>} : memref<2x1xf32, #tpu.memory_space<vmem>>, vector<2x1xf32>,
    } else {
    }
    %c0 = arith.constant 0 : index
    %c0_1 = arith.constant 0 : index
    %c0_2 = arith.constant 0 : index
    %3 = vector.load %arg2[%c0, %c0_1, %c0_2] : memref<1x4x16xf32, #tpu.memory_space<vmem>>, vector<1x4x16xf32>
    %4 = vector.shape_cast %3 : vector<1x4x16xf32> to vector<4x16xf32>
    %cst = arith.constant dense<0.000000e+00> : vector<16xf32>
    %5 = vector.multi_reduction <add>, %4, %cst [0] : vector<4x16xf32> to vector<16xf32>
    %6 = vector.shape_cast %5 : vector<16xf32> to vector<1x16xf32>
    %7 = arith.mulf %4, %4 : vector<4x16xf32>
    %cst_3 = arith.constant dense<0.000000e+00> : vector<16xf32>
    %8 = vector.multi_reduction <add>, %7, %cst_3 [0] : vector<4x16xf32> to vector<16xf32>
    %9 = vector.shape_cast %8 : vector<16xf32> to vector<1x16xf32>
    %10 = tpu.concatenate %6, %9 in 0 : vector<1x16xf32>, vector<1x16xf32> -> vector<2x16xf32>
    %c0_4 = arith.constant 0 : index
    %c0_5 = arith.constant 0 : index
    %11 = vector.load %arg4[%c0_4, %c0_5] : memref<2x1xf32, #tpu.memory_space<vmem>>, vector<2x1xf32>
    %12 = tpu.iota {dimensions = array<i32: 1>} : vector<2x16xi32>
    %c1_i32 = arith.constant 1 : i32
    %13 = tpu.dynamic_rotate %10 by %c1_i32 dim 1 : vector<2x16xf32>, i32 -> vector<2x16xf32>
    %c1_i32_6 = arith.constant 1 : i32
    %14 = vector.broadcast %c1_i32_6 : i32 to vector<2x16xi32>
    %15 = arith.cmpi sge, %12, %14 : vector<2x16xi32>
    %cst_7 = arith.constant 0.000000e+00 : f32
    %16 = vector.broadcast %cst_7 : f32 to vector<2x16xf32>
    %17 = arith.select %15, %13, %16 : vector<2x16xi1>, vector<2x16xf32>
    %18 = arith.addf %10, %17 : vector<2x16xf32>
    %c2_i32 = arith.constant 2 : i32
    %19 = tpu.dynamic_rotate %18 by %c2_i32 dim 1 : vector<2x16xf32>, i32 -> vector<2x16xf32>
    %c2_i32_8 = arith.constant 2 : i32
    %20 = vector.broadcast %c2_i32_8 : i32 to vector<2x16xi32>
    %21 = arith.cmpi sge, %12, %20 : vector<2x16xi32>
    %cst_9 = arith.constant 0.000000e+00 : f32
    %22 = vector.broadcast %cst_9 : f32 to vector<2x16xf32>
    %23 = arith.select %21, %19, %22 : vector<2x16xi1>, vector<2x16xf32>
    %24 = arith.addf %18, %23 : vector<2x16xf32>
    %c4_i32 = arith.constant 4 : i32
    %25 = tpu.dynamic_rotate %24 by %c4_i32 dim 1 : vector<2x16xf32>, i32 -> vector<2x16xf32>
    %c4_i32_10 = arith.constant 4 : i32
    %26 = vector.broadcast %c4_i32_10 : i32 to vector<2x16xi32>
    %27 = arith.cmpi sge, %12, %26 : vector<2x16xi32>
    %cst_11 = arith.constant 0.000000e+00 : f32
    %28 = vector.broadcast %cst_11 : f32 to vector<2x16xf32>
    %29 = arith.select %27, %25, %28 : vector<2x16xi1>, vector<2x16xf32>
    %30 = arith.addf %24, %29 : vector<2x16xf32>
    %c8_i32 = arith.constant 8 : i32
    %31 = tpu.dynamic_rotate %30 by %c8_i32 dim 1 : vector<2x16xf32>, i32 -> vector<2x16xf32>
    %c8_i32_12 = arith.constant 8 : i32
    %32 = vector.broadcast %c8_i32_12 : i32 to vector<2x16xi32>
    %33 = arith.cmpi sge, %12, %32 : vector<2x16xi32>
    %cst_13 = arith.constant 0.000000e+00 : f32
    %34 = vector.broadcast %cst_13 : f32 to vector<2x16xf32>
    %35 = arith.select %33, %31, %34 : vector<2x16xi1>, vector<2x16xf32>
    %36 = arith.addf %30, %35 : vector<2x16xf32>
    %37 = vector.broadcast %11 : vector<2x1xf32> to vector<2x16xf32>
    %38 = arith.addf %36, %37 : vector<2x16xf32>
    %cst_14 = arith.constant dense<0.000000e+00> : vector<2xf32>
    %39 = vector.multi_reduction <add>, %10, %cst_14 [1] : vector<2x16xf32> to vector<2xf32>
    %40 = vector.shape_cast %39 : vector<2xf32> to vector<2x1xf32>
    %41 = arith.addf %11, %40 : vector<2x1xf32>
    %c0_15 = arith.constant 0 : index
    %c0_16 = arith.constant 0 : index
    %42 = vector.load %arg4[%c0_15, %c0_16] : memref<2x1xf32, #tpu.memory_space<vmem>>, vector<2x1xf32>
    tpu.vector_store %arg4[%c0_15, %c0_16], %41 {strides = array<i32>} : memref<2x1xf32, #tpu.memory_space<vmem>>, vector<2x1xf32>,
    %43 = tpu.iota {dimensions = array<i32: 1>} : vector<1x16xi32>
    %c16_i32 = arith.constant 16 : i32
    %44 = arith.muli %arg1, %c16_i32 : i32
    %45 = vector.broadcast %44 : i32 to vector<1x16xi32>
    %46 = arith.addi %43, %45 : vector<1x16xi32>
    %c1_i32_17 = arith.constant 1 : i32
    %47 = vector.broadcast %c1_i32_17 : i32 to vector<1x16xi32>
    %48 = arith.addi %46, %47 : vector<1x16xi32>
    %49 = arith.sitofp %48 : vector<1x16xi32> to vector<1x16xf32>
    %cst_18 = arith.constant 4.000000e+00 : f32
    %50 = vector.broadcast %cst_18 : f32 to vector<1x16xf32>
    %51 = arith.mulf %50, %49 : vector<1x16xf32>
    %cst_19 = arith.constant 1.000000e+00 : f32
    %52 = vector.broadcast %cst_19 : f32 to vector<1x16xf32>
    %53 = arith.divf %52, %51 : vector<1x16xf32>
    %54 = vector.extract_strided_slice %38 {offsets = [0, 0], sizes = [1, 16], strides = [1, 1]} : vector<2x16xf32> to vector<1x16xf32>
    %55 = arith.mulf %54, %53 : vector<1x16xf32>
    %56 = vector.extract_strided_slice %38 {offsets = [1, 0], sizes = [1, 16], strides = [1, 1]} : vector<2x16xf32> to vector<1x16xf32>
    %57 = arith.mulf %56, %53 : vector<1x16xf32>
    %58 = arith.mulf %55, %55 : vector<1x16xf32>
    %59 = arith.subf %57, %58 : vector<1x16xf32>
    %cst_20 = arith.constant 0.000000e+00 : f32
    %60 = vector.broadcast %cst_20 : f32 to vector<1x16xf32>
    %61 = arith.maximumf %59, %60 : vector<1x16xf32>
    %62 = math.rsqrt %61 : vector<1x16xf32>
    %c0_21 = arith.constant 0 : index
    %c0_22 = arith.constant 0 : index
    %c0_23 = arith.constant 0 : index
    %63 = vector.load %arg2[%c0_21, %c0_22, %c0_23] : memref<1x4x16xf32, #tpu.memory_space<vmem>>, vector<1x4x16xf32>
    %64 = vector.shape_cast %63 : vector<1x4x16xf32> to vector<4x16xf32>
    %65 = vector.broadcast %55 : vector<1x16xf32> to vector<4x16xf32>
    %66 = arith.subf %64, %65 : vector<4x16xf32>
    %67 = vector.broadcast %62 : vector<1x16xf32> to vector<4x16xf32>
    %68 = arith.mulf %66, %67 : vector<4x16xf32>
    %c0_24 = arith.constant 0 : index
    %c0_25 = arith.constant 0 : index
    %c0_26 = arith.constant 0 : index
    %69 = vector.load %arg3[%c0_24, %c0_25, %c0_26] : memref<1x4x16xf32, #tpu.memory_space<vmem>>, vector<1x4x16xf32>
    %70 = vector.shape_cast %69 : vector<1x4x16xf32> to vector<4x16xf32>
    %71 = vector.shape_cast %68 : vector<4x16xf32> to vector<1x4x16xf32>
    tpu.vector_store %arg3[%c0_24, %c0_25, %c0_26], %71 {strides = array<i32>} : memref<1x4x16xf32, #tpu.memory_space<vmem>>, vector<1x4x16xf32>,
    return
  }
  func.func @transform_0(%arg0: i32, %arg1: i32) -> (i32, i32, i32) {
    %c0_i32 = arith.constant 0 : i32
    %c0_i32_0 = arith.constant 0 : i32
    return %arg0, %c0_i32, %arg1 : i32, i32, i32
  }
  func.func @transform_1(%arg0: i32, %arg1: i32) -> (i32, i32, i32) {
    %c0_i32 = arith.constant 0 : i32
    %c0_i32_0 = arith.constant 0 : i32
    return %arg0, %c0_i32, %arg1 : i32, i32, i32
  }
}

</mosaic_0001>

<llo_original>
// kernel: tpu_custom_call.1
$region0: #{tpu_custom_call.1}
  #allocation0 [shape = 'u32[]', space=smem, size = 0x4, offset = 0x4, fixed_abs, tag = 'smem constant byte address 0x4 - core index']
  #allocation1 [shape = 'u32[144,128]{1,0:T(1,128)}', space=vmem, size = 0x12000, scoped, tag = 'internal scratch']
  #allocation2 [shape = 'f32[2,1]{1,0:T(2,128)}', space=vmem, size = 0x400, scoped, tag = 'scratch operand']
  %s0 = inlined_call_operand.hbm [shape: f32[2,4,16], index: 0, kind: input, shape index: {}]
  %s1 = inlined_call_operand.hbm [shape: f32[2,4,16], index: 1, kind: output, shape index: {}]
  %s2 = sld [smem:[#allocation0]]
  $region45: #{tpu_custom_call.1} parent=0
    _
  %s4 = ssub.s32 1, %s2
  %s5 = scalar_select 0, %s4, %s2
  $region1: #{tpu_custom_call.1} parent=0
    #allocation3 [shape = 'u8[4096]{0}', space=vmem, size = 0x1000, scoped, tag = 'input window, operand 0']
    #allocation4 [shape = 's32[2]{0}', space=sflag, size = 0x8, scoped, tag = 'scoped memory for tpu_custom_call.1']
    #allocation5 [shape = 's32[2]{0}', space=sflag, size = 0x8, scoped, tag = 'scoped memory for tpu_custom_call.1']
    #allocation6 [shape = 'u8[4096]{0}', space=vmem, size = 0x1000, scoped, tag = 'output window, operand 0']
    %6 = vsyncpa [#allocation4], 0
    %s7 = scalar_lea.sflag [#allocation4], 1
    %8 = vsyncpa %s7, 0
    %9 = vsyncpa [#allocation5], 0
    %s10 = scalar_lea.sflag [#allocation5], 1
    %11 = vsyncpa %s10, 0
    loop: start=0, step=1, limit=4
    $region2: #{tpu_custom_call.1} parent=1 // loop_pre_header
      _
    $region3: #{tpu_custom_call.1} parent=1 // loop_header
      %s13 = sphi 0, %s17
      %p14 = scmp.ge.s32.totalorder %s13, 4
      %s20 = sphi 0, %s32
      %s21 = sphi 0, %s28
      %s22 = sphi 0, %s20
      %s23 = sphi 0, %s21
      %s24 = sphi 0, %s22
      %s25 = sphi 0, %s23
      %s37 = sphi 0, %s39
      %s40 = sphi 0, %s37
      %s41 = sphi 0, %s40
      %s57 = sphi 0, %s41
      %s65 = sphi 0, %s67
      %s68 = sphi 0, %s65
      %s69 = sphi 0, %s68
      %s85 = sphi 0, %s69
    $region4: #{tpu_custom_call.1} parent=1 // loop_header_branch
      %16 = sbr.rel (%p14) target = $region8
    $region5: #{tpu_custom_call.1} parent=1 // loop_body
      %s18 = ssub.s32 %s13, 1
      %s19 = ssub.s32 %s13, 2
      %s26 = sadd.s32 1, %s21
      %p27 = scmp.ge.s32.totalorder %s26, 1
      %s28 = scalar_select %p27, 0, %s26
      %s29 = sadd.s32 1, %s20
      %s30 = scalar_select %p27, %s29, %s20
      %p31 = scmp.ge.s32.totalorder %s30, 2
      %s32 = scalar_select %p31, 0, %s30
      %s33 = ssub.s32 %s20, %s32
      %s34 = ssub.s32 %s21, %s28
      %s35 = sor.u32 %s33, %s34
      %p36 = scmp.eq.s32.totalorder %s35, 0
      %s38 = sadd.s32 %s37, 1
      %s39 = scalar_select %p36, %s37, %s38
      %p42 = pneg %p36
      %p43 = scmp.eq.s32.totalorder %s13, 1
      %p44 = por %p42, %p43
      %p45 = scmp.ne.s32.totalorder %s37, %s40
      %p46 = scmp.eq.s32.totalorder %s13, 0
      %p47 = por %p45, %p46
      %p48 = scmp.ne.s32.totalorder %s37, %s40
      %p49 = scmp.eq.s32.totalorder %s18, 1
      %p50 = por %p48, %p49
      %p51 = scmp.ne.s32.totalorder %s40, %s41
      %p52 = scmp.eq.s32.totalorder %s18, 0
      %p53 = por %p51, %p52
      %p54 = scmp.ne.s32.totalorder %s40, %s41
      %p55 = scmp.eq.s32.totalorder %s19, 1
      %p56 = por %p54, %p55
      %p58 = scmp.ne.s32.totalorder %s41, %s57
      %p59 = scmp.eq.s32.totalorder %s19, 0
      %p60 = por %p58, %p59
      %s61 = ssub.s32 %s20, %s32
      %s62 = ssub.s32 %s21, %s28
      %s63 = sor.u32 %s61, %s62
      %p64 = scmp.eq.s32.totalorder %s63, 0
      %s66 = sadd.s32 %s65, 1
      %s67 = scalar_select %p64, %s65, %s66
      %p70 = pneg %p64
      %p71 = scmp.eq.s32.totalorder %s13, 1
      %p72 = por %p70, %p71
      %p73 = scmp.ne.s32.totalorder %s65, %s68
      %p74 = scmp.eq.s32.totalorder %s13, 0
      %p75 = por %p73, %p74
      %p76 = scmp.ne.s32.totalorder %s65, %s68
      %p77 = scmp.eq.s32.totalorder %s18, 1
      %p78 = por %p76, %p77
      %p79 = scmp.ne.s32.totalorder %s68, %s69
      %p80 = scmp.eq.s32.totalorder %s18, 0
      %p81 = por %p79, %p80
      %p82 = scmp.ne.s32.totalorder %s68, %s69
      %p83 = scmp.eq.s32.totalorder %s19, 1
      %p84 = por %p82, %p83
      %p86 = scmp.ne.s32.totalorder %s69, %s85
      %p87 = scmp.eq.s32.totalorder %s19, 0
      %p88 = por %p86, %p87
      %p89 = scmp.le.s32.totalorder 1, %s13
      %p90 = scmp.lt.s32.totalorder %s13, 3
      %p91 = pnand %p89, %p90
      %p92 = pneg %p91
      // Predicated region
      $region9: #{tpu_custom_call.1} parent=5 // pred_check
        _
      $region10: #{tpu_custom_call.1} parent=5 // pred_check_branch
        %94 = sbr.rel (%p91) target = $region12
      $region11: #{tpu_custom_call.1} parent=5 // pred_region
        %s95 = ssub.s32 %s13, 1
      $region12: #{tpu_custom_call.1} parent=5 // pred_fallthru
        _
      %p96 = scmp.lt.s32.totalorder %s13, 2
      // Predicated region
      $region13: #{tpu_custom_call.1} parent=5 // pred_check
        %p97 = pneg %p96
      $region14: #{tpu_custom_call.1} parent=5 // pred_check_branch
        %99 = sbr.rel (%p97) target = $region16
      $region15: #{tpu_custom_call.1} parent=5 // pred_region
        // Predicated region
        $region17: #{tpu_custom_call.1} parent=15 // pred_check
          %p100 = pneg %p47
        $region18: #{tpu_custom_call.1} parent=15 // pred_check_branch
          %102 = sbr.rel (%p100) target = $region20
        $region19: #{tpu_custom_call.1} parent=15 // pred_region
          %s103 = sand.u32 %s37, 1
          %s104 = scalar_lea.sflag [#allocation4], %s103
          %s105 = sand.u32 %s37, 1
          %s106 = smul.addr %s105, 4
          %s107 = scalar_lea.vmem [#allocation3], %s106
          %s109 = ssub.s32 64, 64
          %110 = vsyncadd %s104, %s109
          %s111 = sadd.s32 %s21, %s20
          %s112 = smul.addr %s111, 64
          %s113 = scalar_lea.hbm %s0, %s112
          %s115 = sshll.u32 %s107, 4
          %s116 = int_to_ptr.vmem [resolvable:$true] %s115
          %118 = dma.hbm_to_vmem [thread:$0]  %s113, 64, %s116, %s104
        $region20: #{tpu_custom_call.1} parent=15 // pred_fallthru
          _
      $region16: #{tpu_custom_call.1} parent=5 // pred_fallthru
        _
      %p119 = scmp.le.s32.totalorder 1, %s13
      %p120 = scmp.lt.s32.totalorder %s13, 3
      %p121 = pnand %p119, %p120
      %p122 = pneg %p121
      // Predicated region
      $region21: #{tpu_custom_call.1} parent=5 // pred_check
        _
      $region22: #{tpu_custom_call.1} parent=5 // pred_check_branch
        %124 = sbr.rel (%p121) target = $region24
      $region23: #{tpu_custom_call.1} parent=5 // pred_region
        %s125 = ssub.s32 %s13, 1
        %s126 = sand.u32 %s40, 1
        %s127 = scalar_lea.sflag [#allocation4], %s126
        %s128 = sand.u32 %s40, 1
        %s129 = smul.addr %s128, 4
        %s130 = scalar_lea.vmem [#allocation3], %s129
        // Predicated region
        $region25: #{tpu_custom_call.1} parent=23 // pred_check
          %p131 = pneg %p53
        $region26: #{tpu_custom_call.1} parent=23 // pred_check_branch
          %133 = sbr.rel (%p131) target = $region28
        $region27: #{tpu_custom_call.1} parent=23 // pred_region
          %134 = dma.done %s127, 64
        $region28: #{tpu_custom_call.1} parent=23 // pred_fallthru
          _
        %s135 = sand.u32 %s40, 1
        %s136 = scalar_lea.sflag [#allocation4], %s135
        %s137 = sand.u32 %s40, 1
        %s138 = smul.addr %s137, 4
        %s139 = scalar_lea.vmem [#allocation3], %s138
        %p140 = pneg %p53
        %p141 = pneg %p50
        %p142 = pneg %p81
        %p143 = pneg %p78
        %s144 = sand.u32 %s68, 1
        %s145 = scalar_lea.sflag [#allocation5], %s144
        %s146 = sand.u32 %s68, 1
        %s147 = smul.addr %s146, 4
        %s148 = scalar_lea.vmem [#allocation6], %s147
        %p149 = scmp.eq.s32.totalorder %s23, 0
        // Predicated region
        $region29: #{tpu_custom_call.1} parent=23 // pred_check
          %p150 = pneg %p149
        $region30: #{tpu_custom_call.1} parent=23 // pred_check_branch
          %152 = sbr.rel (%p150) target = $region32
        $region31: #{tpu_custom_call.1} parent=23 // pred_region
          %vm153 = vcmask 1024
          %154 = vst.msk [vmem:[#allocation2] sm:$0x3] %vm153, 0.0
        $region32: #{tpu_custom_call.1} parent=23 // pred_fallthru
          _
        %v155 = vld [vmem:[%s130] sm:$0xf]
        %vm156 = vcmask 125952
        %v157 = vsel %vm156, %v155, 0.0
        %v158 = vrot.slane %v157, 4
        %v159 = vadd.f32 %v157, %v158
        %v160 = vrot.slane %v159, 2
        %v161 = vadd.f32 %v159, %v160
        %v162 = vrot.slane %v161, 1
        %v163 = vadd.f32 %v161, %v162
        %v164 = vmul.f32 %v155, %v155
        %v165 = vsel %vm156, %v164, 0.0
        %v166 = vrot.slane %v165, 4
        %v167 = vadd.f32 %v165, %v166
        %v168 = vrot.slane %v167, 2
        %v169 = vadd.f32 %v167, %v168
        %v170 = vrot.slane %v169, 1
        %v171 = vadd.f32 %v169, %v170
        %vm172 = vcmask 1040384
        %v173 = vsel %vm172, %v163, %v171
        %v174 = vld [vmem:[#allocation2] sm:$0x3]
        %v175 = vlaneseq
        %v176 = vand.u32 %v175, 127
        %vm177 = vcmask 1047680
        %178 = vrot.lane.b32.xlu0 %v173, 16
        %v179 = vpop.permute.xlu0 %178
        %v180 = vsel %vm177, %v179, %v173
        %181 = vrot.lane.b32.xlu0 %v180, 16
        %v182 = vpop.permute.xlu0 %181
        %v183 = vsel %vm177, %v182, %v173
        %vm184 = vcmp.ge.s32.totalorder %v176, 1
        %186 = vrot.lane.b32.xlu0 %v183, 113
        %v187 = vpop.permute.xlu0 %186
        %v189 = vsel %vm184, %v187, 0.0
        %v190 = vadd.f32 %v173, %v189
        %191 = vrot.lane.b32.xlu0 %v190, 16
        %v192 = vpop.permute.xlu0 %191
        %v193 = vsel %vm177, %v192, %v190
        %194 = vrot.lane.b32.xlu0 %v193, 16
        %v195 = vpop.permute.xlu0 %194
        %v196 = vsel %vm177, %v195, %v190
        %vm197 = vcmp.ge.s32.totalorder %v176, 2
        %199 = vrot.lane.b32.xlu0 %v196, 114
        %v200 = vpop.permute.xlu0 %199
        %v202 = vsel %vm197, %v200, 0.0
        %v203 = vadd.f32 %v190, %v202
        %204 = vrot.lane.b32.xlu0 %v203, 16
        %v205 = vpop.permute.xlu0 %204
        %v206 = vsel %vm177, %v205, %v203
        %207 = vrot.lane.b32.xlu0 %v206, 16
        %v208 = vpop.permute.xlu0 %207
        %v209 = vsel %vm177, %v208, %v203
        %vm210 = vcmp.ge.s32.totalorder %v176, 4
        %212 = vrot.lane.b32.xlu0 %v209, 116
        %v213 = vpop.permute.xlu0 %212
        %v215 = vsel %vm210, %v213, 0.0
        %v216 = vadd.f32 %v203, %v215
        %217 = vrot.lane.b32.xlu0 %v216, 16
        %v218 = vpop.permute.xlu0 %217
        %v219 = vsel %vm177, %v218, %v216
        %220 = vrot.lane.b32.xlu0 %v219, 16
        %v221 = vpop.permute.xlu0 %220
        %v222 = vsel %vm177, %v221, %v216
        %vm223 = vcmp.ge.s32.totalorder %v176, 8
        %225 = vrot.lane.b32.xlu0 %v222, 120
        %v226 = vpop.permute.xlu0 %225
        %v228 = vsel %vm223, %v226, 0.0
        %v229 = vadd.f32 %v216, %v228
        %231 = vset.pattern.permute.xlu0 0
        %232 = vperm.xlu0 %231, %v174
        %v233 = vpop.permute.xlu0 %232
        %v235 = vadd.f32 %v229, %v233
        %vm236 = vcmask 123904
        %v237 = vsel %vm236, %v173, 0.0
        %238 = vadd.xlane.f32.xlu0 %v237
        %v239 = vpop.xlane.xlu0 %238
        %v240 = vadd.f32 %v174, %v239
        %vm241 = vcmask 1024
        %242 = vst.msk [vmem:[#allocation2] sm:$0x3] %vm241, %v240
        %s243 = smul.u32 %s23, 16
        %v244 = vstv %s243
        %v245 = vadd.s32 %v176, %v244
        %v246 = vadd.s32 %v245, 1
        %v247 = vcvt.s32.f32 %v246
        %v248 = vmul.f32 %v247, 4.0
        %v249 = vrcp.pop %v248
        %v250 = vmul.f32 1.0, %v249
        %v251 = vmul.f32 %v235, %v250
        %v252 = vmul.f32 %v251, %v251
        %v254 = vrot.slane %v252, 7
        %v256 = vsub.f32 %v251, %v254
        %v257 = vmax.f32 %v256, 0.0
        %v258 = vrsqrt.pop %v257
        %v259 = vld [vmem:[%s130] sm:$0xf]
        %v260 = vlaneseq
        %v261 = vshrl.u32 %v260, 7
        %v262 = vsub.s32 0, %v261
        %v263 = vrot.slane %v251, %v262
        %v264 = vsub.f32 %v259, %v263
        %v265 = vlaneseq
        %v266 = vshrl.u32 %v265, 7
        %v267 = vsub.s32 1, %v266
        %v268 = vrot.slane %v258, %v267
        %v269 = vmul.f32 %v264, %v268
        %270 = vst.msk [vmem:[%s148] sm:$0xf] %vm156, %v269
        %s271 = sand.u32 %s68, 1
        %s272 = scalar_lea.sflag [#allocation5], %s271
        %s273 = sand.u32 %s68, 1
        %s274 = smul.addr %s273, 4
        %s275 = scalar_lea.vmem [#allocation6], %s274
        // Predicated region
        $region33: #{tpu_custom_call.1} parent=23 // pred_check
          %p276 = pneg %p78
        $region34: #{tpu_custom_call.1} parent=23 // pred_check_branch
          %278 = sbr.rel (%p276) target = $region36
        $region35: #{tpu_custom_call.1} parent=23 // pred_region
          %s280 = ssub.s32 64, 64
          %281 = vsyncadd %s272, %s280
          %s282 = sadd.s32 %s23, %s22
          %s283 = smul.addr %s282, 64
          %s284 = scalar_lea.hbm %s1, %s283
          %s286 = sshll.u32 %s275, 4
          %s287 = int_to_ptr.vmem [resolvable:$true] %s286
          %289 = dma.vmem_to_hbm [thread:$0]  %s287, 64, %s284, %s272
        $region36: #{tpu_custom_call.1} parent=23 // pred_fallthru
          _
      $region24: #{tpu_custom_call.1} parent=5 // pred_fallthru
        _
      %p290 = scmp.le.s32.totalorder 2, %s13
      // Predicated region
      $region37: #{tpu_custom_call.1} parent=5 // pred_check
        %p291 = pneg %p290
      $region38: #{tpu_custom_call.1} parent=5 // pred_check_branch
        %293 = sbr.rel (%p291) target = $region40
      $region39: #{tpu_custom_call.1} parent=5 // pred_region
        %s294 = ssub.s32 %s13, 2
        // Predicated region
        $region41: #{tpu_custom_call.1} parent=39 // pred_check
          %p295 = pneg %p84
        $region42: #{tpu_custom_call.1} parent=39 // pred_check_branch
          %297 = sbr.rel (%p295) target = $region44
        $region43: #{tpu_custom_call.1} parent=39 // pred_region
          %s298 = sand.u32 %s69, 1
          %s299 = scalar_lea.sflag [#allocation5], %s298
          %s300 = sand.u32 %s69, 1
          %s301 = smul.addr %s300, 4
          %s302 = scalar_lea.vmem [#allocation6], %s301
          %303 = dma.done %s299, 64
        $region44: #{tpu_custom_call.1} parent=39 // pred_fallthru
          _
      $region40: #{tpu_custom_call.1} parent=5 // pred_fallthru
        _
    $region6: #{tpu_custom_call.1} parent=1 // loop_footer
      %s17 = sadd.s32 1, %s13
    $region7: #{tpu_custom_call.1} parent=1 // loop_footer_branch
      %12 = sbr.rel target = $region3
    $region8: #{tpu_custom_call.1} parent=1 // loop_exit
      _
    %304 = vsyncpa [#allocation4], 1
    %s305 = scalar_lea.sflag [#allocation4], 1
    %306 = vsyncpa %s305, 1
    %307 = vsyncpa [#allocation5], 1
    %s308 = scalar_lea.sflag [#allocation5], 1
    %309 = vsyncpa %s308, 1

</llo_original>
